<compile_context>
chip_gen: v5e
topology: v5e:2x2
jax: 0.10.0
libtpu: 0.0.40
codegen_flags: <defaults>
</compile_context>

<pallas_src>
import functools

import jax
import jax.numpy as jnp
from jax.experimental import pallas as pl
from jax.experimental.pallas import tpu as pltpu


def _cw_partials_kernel(logits_ref, targets_ref, partial_ref, *,
                        margin, total_b, tile_b, mask_ragged):
    """Writes sum over this batch tile of clamp(self - other + margin, 0).

    logits_ref : (C, TILE_B) block, native float dtype (batch on lanes)
    targets_ref: (1, TILE_B) int32 block
    partial_ref: (num_tiles, 1) f32, resident in SMEM
    """
    i = pl.program_id(0)

    logits = logits_ref[...]                      # (C, TB), native dtype
    tgt = targets_ref[...]                        # (1, TB) int32
    cdt = logits.dtype

    class_ids = jax.lax.broadcasted_iota(jnp.int32, logits.shape, 0)
    is_target = class_ids == tgt                  # (C, TB), sublane broadcast

    # self  = sum_c(onehot * logits)              == logits[target]   (exact)
    # other = max_c((1 - onehot) * logits - onehot * 1000)
    #       = max_c(where(target, -1000, logits))  (exact PyTorch formula)
    zero = jnp.zeros((), cdt)
    neg_fill = jnp.full((), -1000.0, cdt)
    self_v = jnp.sum(jnp.where(is_target, logits, zero),
                     axis=0, keepdims=True)       # (1, TB)
    other_v = jnp.max(jnp.where(is_target, neg_fill, logits),
                      axis=0, keepdims=True)      # (1, TB)

    per_sample = jnp.maximum(self_v.astype(jnp.float32)
                             - other_v.astype(jnp.float32)
                             + jnp.float32(margin), 0.0)      # (1, TB) f32

    if mask_ragged:
        # Zero padded lanes of the ragged last tile so the wrapper's mean
        # divides by the *global* batch size (also neutralizes garbage reads).
        col_ids = i * tile_b + jax.lax.broadcasted_iota(jnp.int32,
                                                        per_sample.shape, 1)
        per_sample = jnp.where(col_ids < total_b, per_sample, 0.0)

    partial_ref[i, 0] = jnp.sum(per_sample)


def _pick_tile_b(num_classes, itemsize):
    """Largest lane-aligned batch tile whose *real* VMEM footprint fits.

    Per lane-column (one sample), accounting for sublane padding:
      logits block : ceil(C*itemsize/32)*32 bytes, x2 (double buffered)
      targets block: 32 bytes (int32 row pads to 8 sublanes), x2
      temporaries  : ~8 live f32-width copies of the padded class column
    """
    sub_col = 32                                   # one (8,128) f32 tile column
    logits_col = -(-(num_classes * itemsize) // sub_col) * sub_col
    targets_col = sub_col
    temps_col = 8 * (-(-(num_classes * 4) // sub_col) * sub_col)
    per_col = 2 * (logits_col + targets_col) + temps_col
    budget = 24 * 1024 * 1024                      # < 32 MiB scoped VMEM limit
    tb = budget // per_col
    return max(128, (tb // 128) * 128)


def cw_loss(logits, targets, *, num_classes=10, margin=50.0, reduce=True,
            tile_b=None):
    """Pallas CW loss.

    logits:  (B, num_classes) float (f32 or bf16, read in native dtype)
    targets: (B,) integer class indices
    returns: scalar float32
    """
    B, C = logits.shape
    assert C == num_classes
    if not jnp.issubdtype(logits.dtype, jnp.floating):
        logits = logits.astype(jnp.float32)

    # Batch on lanes, classes on sublanes.
    # TODO(synk): have the producer emit (C, B) directly to skip this transpose.
    logits_t = logits.T                                  # (C, B)
    targets_row = targets.reshape(1, B).astype(jnp.int32)

    if tile_b is None:
        tile_b = _pick_tile_b(C, logits.dtype.itemsize)
    tile_b = int(tile_b)
    if tile_b >= B:
        tile_b = B                                       # single full-extent tile
    else:
        assert tile_b % 128 == 0, "batch tile must be lane-aligned (x128)"
    grid = pl.cdiv(B, tile_b)
    mask_ragged = (B % tile_b) != 0

    kernel = functools.partial(_cw_partials_kernel,
                               margin=float(margin),
                               total_b=B,
                               tile_b=tile_b,
                               mask_ragged=mask_ragged)

    cost = pl.CostEstimate(
        flops=6 * B * C,
        transcendentals=0,
        bytes_accessed=B * C * logits.dtype.itemsize + B * 4 + grid * 4,
    )

    partials = pl.pallas_call(
        kernel,
        out_shape=jax.ShapeDtypeStruct((grid, 1), jnp.float32),
        grid=(grid,),
        in_specs=[
            pl.BlockSpec((C, tile_b), lambda i: (0, i)),   # logits tile (VMEM)
            pl.BlockSpec((1, tile_b), lambda i: (0, i)),   # targets tile (VMEM)
        ],
        # (grid, 1) partial-sum vector resident in SMEM for the whole grid;
        # each step writes its own slot.
        out_specs=pl.BlockSpec(memory_space=pltpu.SMEM),
        compiler_params=pltpu.CompilerParams(
            dimension_semantics=("arbitrary",),
            vmem_limit_bytes=32 * 1024 * 1024),
        cost_estimate=cost,
    )(logits_t, targets_row)

    loss = -jnp.sum(partials)
    if reduce:
        loss = loss / jnp.float32(B)     # divide by GLOBAL batch size
    return loss


def cw_loss_ref(logits, targets, *, num_classes=10, margin=50.0, reduce=True):
    """Pure-JAX reference mirroring the PyTorch module (f32 math)."""
    logits = logits.astype(jnp.float32)
    onehot = jax.nn.one_hot(targets, num_classes, dtype=jnp.float32)
    self_loss = jnp.sum(onehot * logits, axis=1)
    other_loss = jnp.max((1.0 - onehot) * logits - onehot * 1000.0, axis=1)
    loss = -jnp.sum(jnp.maximum(self_loss - other_loss + margin, 0.0))
    if reduce:
        loss = loss / logits.shape[0]
    return loss


if __name__ == "__main__":
    key = jax.random.PRNGKey(0)
    k1, k2, k3, k4 = jax.random.split(key, 4)

    NUM_CLASSES = 10

    # Case 1: module-default small shape, f32, single tile.
    B = 8
    logits = jax.random.normal(k1, (B, NUM_CLASSES), jnp.float32) * 5.0
    targets = jax.random.randint(k2, (B,), 0, NUM_CLASSES, dtype=jnp.int32)
    out = jax.block_until_ready(
        cw_loss(logits, targets, num_classes=NUM_CLASSES, margin=50.0,
                reduce=True))
    ref = cw_loss_ref(logits, targets, num_classes=NUM_CLASSES, margin=50.0,
                      reduce=True)
    assert jnp.allclose(out, ref, rtol=1e-5, atol=1e-5), (out, ref)

    # Case 2: bf16 logits (native bf16 compute path) + multi-tile grid with a
    # ragged last tile (exercises streaming, lane masking, per-tile partials).
    B2 = 300
    logits2 = (jax.random.normal(k3, (B2, NUM_CLASSES), jnp.float32) * 5.0
               ).astype(jnp.bfloat16)
    targets2 = jax.random.randint(k4, (B2,), 0, NUM_CLASSES, dtype=jnp.int32)
    out2 = jax.block_until_ready(
        cw_loss(logits2, targets2, num_classes=NUM_CLASSES, margin=50.0,
                reduce=True, tile_b=128))
    ref2 = cw_loss_ref(logits2.astype(jnp.float32), targets2,
                       num_classes=NUM_CLASSES, margin=50.0, reduce=True)
    assert jnp.allclose(out2, ref2, rtol=1e-5, atol=1e-3), (out2, ref2)

    print("KERNEL_OK")
</pallas_src>

<mosaic_0001>
module attributes {stable_mosaic.version = 11 : i64} {
  func.func @_cw_partials_kernel(%arg0: i32, %arg1: memref<10x8xf32, #tpu.memory_space<vmem>>, %arg2: memref<1x8xi32, #tpu.memory_space<vmem>>, %arg3: memref<1x1xf32, #tpu.memory_space<smem>>) attributes {dimension_semantics = [#tpu.dimension_semantics<arbitrary>], iteration_bounds = array<i64: 1>, scalar_prefetch = 0 : i64, scratch_operands = 0 : i64, tpu.core_type = #tpu.core_type<tc>, window_params = [{transform_indices = @transform_0, window_bounds = array<i64: 10, 8>}, {transform_indices = @transform_1, window_bounds = array<i64: 1, 8>}, {transform_indices = @transform_2, window_bounds = array<i64: 1, 1>}]} {
    %c0 = arith.constant 0 : index
    %c0_0 = arith.constant 0 : index
    %0 = vector.load %arg1[%c0, %c0_0] : memref<10x8xf32, #tpu.memory_space<vmem>>, vector<10x8xf32>
    %c0_1 = arith.constant 0 : index
    %c0_2 = arith.constant 0 : index
    %1 = vector.load %arg2[%c0_1, %c0_2] : memref<1x8xi32, #tpu.memory_space<vmem>>, vector<1x8xi32>
    %2 = tpu.iota {dimensions = array<i32: 0>} : vector<10x8xi32>
    %3 = vector.broadcast %1 : vector<1x8xi32> to vector<10x8xi32>
    %4 = arith.cmpi eq, %2, %3 : vector<10x8xi32>
    %cst = arith.constant 0.000000e+00 : f32
    %5 = vector.broadcast %cst : f32 to vector<10x8xf32>
    %6 = arith.select %4, %0, %5 : vector<10x8xi1>, vector<10x8xf32>
    %cst_3 = arith.constant dense<0.000000e+00> : vector<8xf32>
    %7 = vector.multi_reduction <add>, %6, %cst_3 [0] : vector<10x8xf32> to vector<8xf32>
    %8 = vector.shape_cast %7 : vector<8xf32> to vector<1x8xf32>
    %cst_4 = arith.constant -1.000000e+03 : f32
    %9 = vector.broadcast %cst_4 : f32 to vector<10x8xf32>
    %10 = arith.select %4, %9, %0 : vector<10x8xi1>, vector<10x8xf32>
    %cst_5 = arith.constant dense<0xFF800000> : vector<8xf32>
    %11 = vector.multi_reduction <maximumf>, %10, %cst_5 [0] : vector<10x8xf32> to vector<8xf32>
    %12 = vector.shape_cast %11 : vector<8xf32> to vector<1x8xf32>
    %13 = arith.subf %8, %12 : vector<1x8xf32>
    %cst_6 = arith.constant 5.000000e+01 : f32
    %14 = vector.broadcast %cst_6 : f32 to vector<1x8xf32>
    %15 = arith.addf %13, %14 : vector<1x8xf32>
    %cst_7 = arith.constant 0.000000e+00 : f32
    %16 = vector.broadcast %cst_7 : f32 to vector<1x8xf32>
    %17 = arith.maximumf %15, %16 : vector<1x8xf32>
    %18 = vector.shape_cast %17 : vector<1x8xf32> to vector<1x1x8xf32>
    %cst_8 = arith.constant dense<0.000000e+00> : vector<1xf32>
    %19 = vector.multi_reduction <add>, %18, %cst_8 [1, 2] : vector<1x1x8xf32> to vector<1xf32>
    %20 = vector.shape_cast %19 : vector<1xf32> to vector<1x1x1xf32>
    %21 = vector.extract %20[0, 0, 0] : f32 from vector<1x1x1xf32>
    %22 = arith.index_cast %arg0 : i32 to index
    %c0_9 = arith.constant 0 : index
    %23 = memref.load %arg3[%22, %c0_9] : memref<1x1xf32, #tpu.memory_space<smem>>
    memref.store %21, %arg3[%22, %c0_9] : memref<1x1xf32, #tpu.memory_space<smem>>
    return
  }
  func.func @transform_0(%arg0: i32) -> (i32, i32) {
    %c0_i32 = arith.constant 0 : i32
    %c0_i32_0 = arith.constant 0 : i32
    return %c0_i32, %arg0 : i32, i32
  }
  func.func @transform_1(%arg0: i32) -> (i32, i32) {
    %c0_i32 = arith.constant 0 : i32
    %c0_i32_0 = arith.constant 0 : i32
    return %c0_i32, %arg0 : i32, i32
  }
  func.func @transform_2(%arg0: i32) -> (i32, i32) {
    %c0_i32 = arith.constant 0 : i32
    %c0_i32_0 = arith.constant 0 : i32
    %c0_i32_1 = arith.constant 0 : i32
    return %c0_i32, %c0_i32_0 : i32, i32
  }
}

</mosaic_0001>

<llo_original>
// kernel: tpu_custom_call.1
$region0: #{tpu_custom_call.1}
  #allocation0 [shape = 'u32[]', space=smem, size = 0x4, offset = 0x4, fixed_abs, tag = 'smem constant byte address 0x4 - core index']
  #allocation1 [shape = 'u32[72,128]{1,0:T(1,128)}', space=vmem, size = 0x9000, scoped, tag = 'internal scratch']
  %s0 = inlined_call_operand.vmem [shape: f32[10,8], index: 0, kind: input, shape index: {}]
  %s1 = inlined_call_operand.vmem [shape: s32[1,8], index: 1, kind: input, shape index: {}]
  %s2 = inlined_call_operand.hbm [shape: f32[1,1], index: 2, kind: output, shape index: {}]
  %s3 = sld [smem:[#allocation0]]
  $region18: #{tpu_custom_call.1} parent=0
    _
  %s5 = ssub.s32 1, %s3
  %s6 = scalar_select 0, %s5, %s3
  $region1: #{tpu_custom_call.1} parent=0
    #allocation2 [shape = 'u8[512]{0}', space=smem, size = 0x200, scoped, tag = 'output window, operand 0, single buffered']
    #allocation3 [shape = 's32[1]{0}', space=sflag, size = 0x4, scoped, tag = 'scoped memory for tpu_custom_call.1']
    %7 = vsyncpa [#allocation3], 0
    // Predicated region
    $region2: #{tpu_custom_call.1} parent=1 // pred_check
      _
    $region3: #{tpu_custom_call.1} parent=1 // pred_check_branch
      %9 = sbr.rel (0) target = $region5
    $region4: #{tpu_custom_call.1} parent=1 // pred_region
      _
    $region5: #{tpu_custom_call.1} parent=1 // pred_fallthru
      _
    // Predicated region
    $region6: #{tpu_custom_call.1} parent=1 // pred_check
      _
    $region7: #{tpu_custom_call.1} parent=1 // pred_check_branch
      %11 = sbr.rel (0) target = $region9
    $region8: #{tpu_custom_call.1} parent=1 // pred_region
      _
    $region9: #{tpu_custom_call.1} parent=1 // pred_fallthru
      _
    %v12 = vld [vmem:[%s0] sm:$0xff]
    %v13 = vld [vmem:[%s0 + $0x8] sm:$0x3]
    %v14 = vld [vmem:[%s1] sm:$0x1]
    %v15 = vlaneseq
    %v16 = vshrl.u32 %v15, 7
    %v17 = vadd.s32 %v16, 8
    %v18 = vperm.slane %v14, 0
    %vm19 = vcmp.eq.s32.totalorder %v16, %v18
    %vm20 = vcmp.eq.s32.totalorder %v17, %v18
    %v21 = vsel %vm19, %v12, 0.0
    %v22 = vsel %vm20, %v13, 0.0
    %vm23 = vcmask 64512
    %v24 = vsel %vm23, %v21, 0.0
    %vm25 = vcmask 58368
    %v26 = vsel %vm25, %v22, 0.0
    %v27 = vadd.f32 %v24, %v26
    %v28 = vrot.slane %v27, 4
    %v29 = vadd.f32 %v27, %v28
    %v30 = vrot.slane %v29, 2
    %v31 = vadd.f32 %v29, %v30
    %v32 = vrot.slane %v31, 1
    %v33 = vadd.f32 %v31, %v32
    %v34 = vsel %vm19, -1000.0, %v12
    %v35 = vsel %vm20, -1000.0, %v13
    %v36 = vsel %vm23, %v34, -inf
    %v37 = vsel %vm25, %v35, -inf
    %v38 = vmax.f32 %v36, %v37
    %v39 = vrot.slane %v38, 4
    %v40 = vmax.f32 %v38, %v39
    %v41 = vrot.slane %v40, 2
    %v42 = vmax.f32 %v40, %v41
    %v43 = vrot.slane %v42, 1
    %v44 = vmax.f32 %v42, %v43
    %v45 = vsub.f32 %v33, %v44
    %v46 = vadd.f32 %v45, 50.0
    %v47 = vmax.f32 %v46, 0.0
    %vm48 = vcmask 57344
    %v49 = vsel %vm48, %v47, 0.0
    %50 = vadd.xlane.f32.xlu0 %v49
    %v51 = vpop.xlane.xlu0 %50
    %v52 = vrot.slane %v51, 4
    %v53 = vadd.f32 %v51, %v52
    %v54 = vrot.slane %v53, 2
    %v55 = vadd.f32 %v53, %v54
    %v56 = vrot.slane %v55, 1
    %v57 = vadd.f32 %v55, %v56
    %s58 = vtos %v57
    %s59 = smul.u32 0, 128
    %s60 = scalar_lea.smem [#allocation2], %s59
    %61 = sst [smem:[%s60]] %s58
    // Predicated region
    $region10: #{tpu_custom_call.1} parent=1 // pred_check
      _
    $region11: #{tpu_custom_call.1} parent=1 // pred_check_branch
      %63 = sbr.rel (0) target = $region13
    $region12: #{tpu_custom_call.1} parent=1 // pred_region
      %65 = vsyncadd [#allocation3], 0
      %s67 = sshll.u32 %s2, 4
      %s68 = int_to_ptr.hbm [resolvable:$true] %s67
      %70 = dma.smem_to_hbm [#allocation2], 16, %s68, [#allocation3]
    $region13: #{tpu_custom_call.1} parent=1 // pred_fallthru
      _
    // Predicated region
    $region14: #{tpu_custom_call.1} parent=1 // pred_check
      _
    $region15: #{tpu_custom_call.1} parent=1 // pred_check_branch
      %72 = sbr.rel (0) target = $region17
    $region16: #{tpu_custom_call.1} parent=1 // pred_region
      %74 = dma.done [#allocation3], 16
    $region17: #{tpu_custom_call.1} parent=1 // pred_fallthru
      _
    %75 = sfence
    %76 = vsyncpa [#allocation3], 1

</llo_original>
